<compile_context>
chip_gen: v6e
topology: v6e:2x2x1
jax: 0.10.0
libtpu: 0.0.40
codegen_flags: <defaults>
</compile_context>

<pallas_src>
import functools

import numpy as np
import jax
import jax.numpy as jnp
from jax import lax
from jax.experimental import pallas as pl
from jax.experimental.pallas import tpu as pltpu

EPS = 1e-5  # nn.InstanceNorm2d default eps


# ---------------------------------------------------------------------------
# Pallas kernel: one packed block of B_TILE samples per grid step.
# refs:
#   x_ref        : (BC, HW)        packed activations (BC = B_TILE * C rows)
#   g*/b*        : (BC, 1)         instance-norm affine params (tiled per sample)
#   w1_ref       : (BC, BC)        block-diag 1x1 conv weight
#   w2_ref/w4_ref: (BC, 9*BC)      fused block-diag 3x3 tap weights (tap-major)
#   m2_ref/m4_ref: (9, HW)         per-tap boundary masks (0/1, f32)
#   o_ref        : (BC, HW)        output block
# static:
#   hw           : H*W
#   offs2/offs4  : tuple of 9 flat tap offsets (dh*W + dw)
# ---------------------------------------------------------------------------
def _block_kernel(x_ref, g1_ref, b1_ref, g2_ref, b2_ref, g4_ref, b4_ref,
                  w1_ref, w2_ref, w4_ref, m2_ref, m4_ref, o_ref,
                  *, hw, offs2, offs4):
    x = x_ref[...]                       # (BC, HW) f32
    inv_hw = 1.0 / float(hw)

    def inorm_relu(y, g_ref, b_ref):
        # Fused stats: one pass of sum and sum-of-squares, var = E[y^2]-E[y]^2.
        s1 = jnp.sum(y, axis=1, keepdims=True)
        s2 = jnp.sum(y * y, axis=1, keepdims=True)
        mean = s1 * inv_hw
        var = s2 * inv_hw - mean * mean
        yn = (y - mean) * lax.rsqrt(var + EPS) * g_ref[...] + b_ref[...]
        return jnp.maximum(yn, 0.0)      # ReLU

    def dilated_3x3(y, wf_ref, m_ref, offs):
        # Build the 9 shifted+masked copies (XLU rolls + VPU masks), stack them
        # along the contraction axis, and do a single MXU matmul.
        parts = []
        for t, off in enumerate(offs):   # static unroll over the 9 taps
            s = (-off) % hw              # pltpu.roll == jnp.roll semantics
            shifted = y if s == 0 else pltpu.roll(y, shift=s, axis=1)
            if t != 4:                   # center tap mask is all-ones
                shifted = shifted * m_ref[pl.ds(t, 1), :]
            parts.append(shifted)
        stacked = jnp.concatenate(parts, axis=0)          # (9*BC, HW)
        return jnp.dot(wf_ref[...], stacked,
                       preferred_element_type=jnp.float32)  # (BC, HW)

    # branch 1: norm1 -> relu -> 1x1 conv (block-diagonal weight)
    y1 = inorm_relu(x, g1_ref, b1_ref)
    out1 = jnp.dot(w1_ref[...], y1, preferred_element_type=jnp.float32)

    # branch 2: norm2 -> relu -> dilated conv2 -> norm4 -> relu -> dilated conv4
    y2 = inorm_relu(x, g2_ref, b2_ref)
    c2 = dilated_3x3(y2, w2_ref, m2_ref, offs2)
    y4 = inorm_relu(c2, g4_ref, b4_ref)
    out2 = dilated_3x3(y4, w4_ref, m4_ref, offs4)

    o_ref[...] = (x + out1 + out2).astype(o_ref.dtype)


# ---------------------------------------------------------------------------
# Host-side constants: per-tap boundary masks + flat offsets.
# mask_t[p] = 1 iff the tap's input position (ph+dh, pw+dw) is in-bounds
# (prevents the flat-HW roll from wrapping pixels across rows / H edges).
# Cached so repeated calls don't rebuild them.
# ---------------------------------------------------------------------------
@functools.lru_cache(maxsize=None)
def _tap_masks(H, W, dilation):
    HW = H * W
    p = np.arange(HW)
    ph, pw = p // W, p % W
    masks, offsets = [], []
    for kh in range(3):
        for kw in range(3):
            dh, dw = (kh - 1) * dilation, (kw - 1) * dilation
            valid = ((ph + dh >= 0) & (ph + dh < H) &
                     (pw + dw >= 0) & (pw + dw < W))
            masks.append(valid.astype(np.float32))
            offsets.append(dh * W + dw)
    return np.stack(masks), tuple(offsets)   # (9, HW), 9 ints


def _pick_batch_tile(N, C):
    # Pack samples so B_TILE*C fills the 8-row f32 sublane tile; keep it a
    # divisor of N.
    target = max(1, -(-8 // C))              # ceil(8 / C)
    bt = 1
    for cand in range(min(N, target), 0, -1):
        if N % cand == 0:
            bt = cand
            break
    return bt


def _const_spec(shape):
    zeros = (0,) * len(shape)
    return pl.BlockSpec(shape, lambda n, _z=zeros: _z)


def four_dilate_conv_res_block_in(x_nchw, params, dilation2, dilation4):
    N, C, H, W = x_nchw.shape
    HW = H * W
    bt = _pick_batch_tile(N, C)
    BC = bt * C

    masks2_np, offs2 = _tap_masks(H, W, dilation2)
    masks4_np, offs4 = _tap_masks(H, W, dilation4)
    masks2 = jnp.asarray(masks2_np)
    masks4 = jnp.asarray(masks4_np)

    eye_b = jnp.eye(bt, dtype=jnp.float32)

    # PyTorch conv weights are (out, in, kh, kw).
    w1 = params["conv1"][:, :, 0, 0].astype(jnp.float32)
    w1_p = jnp.kron(eye_b, w1)                                   # (BC, BC)

    def fuse_taps(w):  # (O, I, 3, 3) -> (BC, 9*BC), tap-major columns
        return jnp.concatenate(
            [jnp.kron(eye_b, w[:, :, kh, kw].astype(jnp.float32))
             for kh in range(3) for kw in range(3)], axis=1)

    w2_p = fuse_taps(params["conv2"])                            # (BC, 9*BC)
    w4_p = fuse_taps(params["conv4"])                            # (BC, 9*BC)

    def pack_cparam(v):  # (C,) -> (BC, 1), repeated per packed sample
        return jnp.tile(v.astype(jnp.float32).reshape(1, C),
                        (bt, 1)).reshape(BC, 1)

    g1 = pack_cparam(params["g1"]); b1 = pack_cparam(params["b1"])
    g2 = pack_cparam(params["g2"]); b2 = pack_cparam(params["b2"])
    g4 = pack_cparam(params["g4"]); b4 = pack_cparam(params["b4"])

    x_flat = x_nchw.astype(jnp.float32).reshape(N * C, HW)

    kernel = functools.partial(_block_kernel, hw=HW, offs2=offs2, offs4=offs4)

    out_flat = pl.pallas_call(
        kernel,
        out_shape=jax.ShapeDtypeStruct((N * C, HW), jnp.float32),
        grid=(N // bt,),
        in_specs=[
            pl.BlockSpec((BC, HW), lambda n: (n, 0)),
            _const_spec((BC, 1)), _const_spec((BC, 1)),
            _const_spec((BC, 1)), _const_spec((BC, 1)),
            _const_spec((BC, 1)), _const_spec((BC, 1)),
            _const_spec((BC, BC)),
            _const_spec((BC, 9 * BC)), _const_spec((BC, 9 * BC)),
            _const_spec((9, HW)), _const_spec((9, HW)),
        ],
        out_specs=pl.BlockSpec((BC, HW), lambda n: (n, 0)),
        compiler_params=pltpu.CompilerParams(
            dimension_semantics=("parallel",),
            # Working set is <1 MiB now; keep the request modest so the kernel
            # is comfortable inside v7x's 64 MiB per-TC VMEM.
            vmem_limit_bytes=16 << 20),
    )(x_flat, g1, b1, g2, b2, g4, b4, w1_p, w2_p, w4_p, masks2, masks4)

    return out_flat.reshape(N, C, H, W)


# ---------------------------------------------------------------------------
# Pure-JAX reference (mirrors the PyTorch forward) for correctness checking.
# ---------------------------------------------------------------------------
def reference_forward(x, params, d2, d4):
    def inorm(y, g, b):
        m = jnp.mean(y, axis=(2, 3), keepdims=True)
        v = jnp.mean((y - m) ** 2, axis=(2, 3), keepdims=True)
        return ((y - m) * lax.rsqrt(v + EPS) * g.reshape(1, -1, 1, 1)
                + b.reshape(1, -1, 1, 1))

    relu = lambda t: jnp.maximum(t, 0.0)
    dn = ("NCHW", "OIHW", "NCHW")
    hi = lax.Precision.HIGHEST

    out1 = lax.conv_general_dilated(
        relu(inorm(x, params["g1"], params["b1"])), params["conv1"],
        (1, 1), [(0, 0), (0, 0)], dimension_numbers=dn, precision=hi)
    out2 = lax.conv_general_dilated(
        relu(inorm(x, params["g2"], params["b2"])), params["conv2"],
        (1, 1), [(d2, d2), (d2, d2)], rhs_dilation=(d2, d2),
        dimension_numbers=dn, precision=hi)
    out2 = lax.conv_general_dilated(
        relu(inorm(out2, params["g4"], params["b4"])), params["conv4"],
        (1, 1), [(d4, d4), (d4, d4)], rhs_dilation=(d4, d4),
        dimension_numbers=dn, precision=hi)
    return x + out1 + out2


if __name__ == "__main__":
    N, C, H, W = 2, 4, 16, 16          # in_channels == out_channels (residual)
    dilation2, dilation4 = 1, 2

    key = jax.random.PRNGKey(0)
    ks = jax.random.split(key, 10)
    x = jax.random.normal(ks[0], (N, C, H, W), jnp.float32)

    # Deterministic synthetic parameters (shapes follow the module __init__).
    params = {
        "g1": 1.0 + 0.1 * jax.random.normal(ks[1], (C,), jnp.float32),
        "b1": 0.1 * jax.random.normal(ks[2], (C,), jnp.float32),
        "g2": 1.0 + 0.1 * jax.random.normal(ks[3], (C,), jnp.float32),
        "b2": 0.1 * jax.random.normal(ks[4], (C,), jnp.float32),
        "g4": 1.0 + 0.1 * jax.random.normal(ks[5], (C,), jnp.float32),
        "b4": 0.1 * jax.random.normal(ks[6], (C,), jnp.float32),
        # conv weights: (out, in, kh, kw), scaled normal init (deterministic).
        "conv1": jax.random.normal(ks[7], (C, C, 1, 1), jnp.float32) / jnp.sqrt(C),
        "conv2": jax.random.normal(ks[8], (C, C, 3, 3), jnp.float32) / jnp.sqrt(9 * C),
        "conv4": jax.random.normal(ks[9], (C, C, 3, 3), jnp.float32) / jnp.sqrt(9 * C),
    }

    out = four_dilate_conv_res_block_in(x, params, dilation2, dilation4)
    out = jax.block_until_ready(out)

    ref = reference_forward(x, params, dilation2, dilation4)
    assert out.shape == (N, C, H, W)
    max_err = float(jnp.max(jnp.abs(out - ref)))
    assert jnp.allclose(out, ref, atol=2e-2, rtol=2e-2), f"max abs err = {max_err}"

    print("KERNEL_OK")
</pallas_src>

<mosaic_0001>
module attributes {stable_mosaic.version = 11 : i64} {
  func.func @_block_kernel(%arg0: i32, %arg1: memref<8x256xf32, #tpu.memory_space<vmem>>, %arg2: memref<8x1xf32, #tpu.memory_space<vmem>>, %arg3: memref<8x1xf32, #tpu.memory_space<vmem>>, %arg4: memref<8x1xf32, #tpu.memory_space<vmem>>, %arg5: memref<8x1xf32, #tpu.memory_space<vmem>>, %arg6: memref<8x1xf32, #tpu.memory_space<vmem>>, %arg7: memref<8x1xf32, #tpu.memory_space<vmem>>, %arg8: memref<8x8xf32, #tpu.memory_space<vmem>>, %arg9: memref<8x72xf32, #tpu.memory_space<vmem>>, %arg10: memref<8x72xf32, #tpu.memory_space<vmem>>, %arg11: memref<9x256xf32, #tpu.memory_space<vmem>>, %arg12: memref<9x256xf32, #tpu.memory_space<vmem>>, %arg13: memref<8x256xf32, #tpu.memory_space<vmem>>) attributes {dimension_semantics = [#tpu.dimension_semantics<parallel>], iteration_bounds = array<i64: 1>, scalar_prefetch = 0 : i64, scratch_operands = 0 : i64, tpu.core_type = #tpu.core_type<tc>, window_params = [{transform_indices = @transform_0, window_bounds = array<i64: 8, 256>}, {pipeline_mode = #tpu.pipeline_mode<synchronous>, transform_indices = @transform_1, window_bounds = array<i64: 8, 1>}, {pipeline_mode = #tpu.pipeline_mode<synchronous>, transform_indices = @transform_2, window_bounds = array<i64: 8, 1>}, {pipeline_mode = #tpu.pipeline_mode<synchronous>, transform_indices = @transform_3, window_bounds = array<i64: 8, 1>}, {pipeline_mode = #tpu.pipeline_mode<synchronous>, transform_indices = @transform_4, window_bounds = array<i64: 8, 1>}, {pipeline_mode = #tpu.pipeline_mode<synchronous>, transform_indices = @transform_5, window_bounds = array<i64: 8, 1>}, {pipeline_mode = #tpu.pipeline_mode<synchronous>, transform_indices = @transform_6, window_bounds = array<i64: 8, 1>}, {pipeline_mode = #tpu.pipeline_mode<synchronous>, transform_indices = @transform_7, window_bounds = array<i64: 8, 8>}, {pipeline_mode = #tpu.pipeline_mode<synchronous>, transform_indices = @transform_8, window_bounds = array<i64: 8, 72>}, {pipeline_mode = #tpu.pipeline_mode<synchronous>, transform_indices = @transform_9, window_bounds = array<i64: 8, 72>}, {pipeline_mode = #tpu.pipeline_mode<synchronous>, transform_indices = @transform_10, window_bounds = array<i64: 9, 256>}, {pipeline_mode = #tpu.pipeline_mode<synchronous>, transform_indices = @transform_11, window_bounds = array<i64: 9, 256>}, {transform_indices = @transform_12, window_bounds = array<i64: 8, 256>}]} {
    %c0 = arith.constant 0 : index
    %c0_0 = arith.constant 0 : index
    %0 = vector.load %arg1[%c0, %c0_0] : memref<8x256xf32, #tpu.memory_space<vmem>>, vector<8x256xf32>
    %cst = arith.constant dense<0.000000e+00> : vector<8xf32>
    %1 = vector.multi_reduction <add>, %0, %cst [1] : vector<8x256xf32> to vector<8xf32>
    %2 = vector.shape_cast %1 : vector<8xf32> to vector<8x1xf32>
    %3 = arith.mulf %0, %0 : vector<8x256xf32>
    %cst_1 = arith.constant dense<0.000000e+00> : vector<8xf32>
    %4 = vector.multi_reduction <add>, %3, %cst_1 [1] : vector<8x256xf32> to vector<8xf32>
    %5 = vector.shape_cast %4 : vector<8xf32> to vector<8x1xf32>
    %cst_2 = arith.constant 3.906250e-03 : f32
    %6 = vector.broadcast %cst_2 : f32 to vector<8x1xf32>
    %7 = arith.mulf %2, %6 : vector<8x1xf32>
    %cst_3 = arith.constant 3.906250e-03 : f32
    %8 = vector.broadcast %cst_3 : f32 to vector<8x1xf32>
    %9 = arith.mulf %5, %8 : vector<8x1xf32>
    %10 = arith.mulf %7, %7 : vector<8x1xf32>
    %11 = arith.subf %9, %10 : vector<8x1xf32>
    %12 = vector.broadcast %7 : vector<8x1xf32> to vector<8x256xf32>
    %13 = arith.subf %0, %12 : vector<8x256xf32>
    %cst_4 = arith.constant 9.99999974E-6 : f32
    %14 = vector.broadcast %cst_4 : f32 to vector<8x1xf32>
    %15 = arith.addf %11, %14 : vector<8x1xf32>
    %16 = math.rsqrt %15 : vector<8x1xf32>
    %17 = vector.broadcast %16 : vector<8x1xf32> to vector<8x256xf32>
    %18 = arith.mulf %13, %17 : vector<8x256xf32>
    %c0_5 = arith.constant 0 : index
    %c0_6 = arith.constant 0 : index
    %19 = vector.load %arg2[%c0_5, %c0_6] : memref<8x1xf32, #tpu.memory_space<vmem>>, vector<8x1xf32>
    %20 = vector.broadcast %19 : vector<8x1xf32> to vector<8x256xf32>
    %21 = arith.mulf %18, %20 : vector<8x256xf32>
    %c0_7 = arith.constant 0 : index
    %c0_8 = arith.constant 0 : index
    %22 = vector.load %arg3[%c0_7, %c0_8] : memref<8x1xf32, #tpu.memory_space<vmem>>, vector<8x1xf32>
    %23 = vector.broadcast %22 : vector<8x1xf32> to vector<8x256xf32>
    %24 = arith.addf %21, %23 : vector<8x256xf32>
    %cst_9 = arith.constant 0.000000e+00 : f32
    %25 = vector.broadcast %cst_9 : f32 to vector<8x256xf32>
    %26 = arith.maximumf %24, %25 : vector<8x256xf32>
    %c0_10 = arith.constant 0 : index
    %c0_11 = arith.constant 0 : index
    %27 = vector.load %arg8[%c0_10, %c0_11] : memref<8x8xf32, #tpu.memory_space<vmem>>, vector<8x8xf32>
    %cst_12 = arith.constant dense<0.000000e+00> : vector<8x256xf32>
    %28 = tpu.matmul %27, %26, %cst_12 {dimension_numbers = #tpu.dot_dimension_numbers<[1], [0], [0], [1], [0, 0, 1, 1], [], []>} : vector<8x8xf32>, vector<8x256xf32>, vector<8x256xf32> -> vector<8x256xf32>
    %cst_13 = arith.constant dense<0.000000e+00> : vector<8xf32>
    %29 = vector.multi_reduction <add>, %0, %cst_13 [1] : vector<8x256xf32> to vector<8xf32>
    %30 = vector.shape_cast %29 : vector<8xf32> to vector<8x1xf32>
    %31 = arith.mulf %0, %0 : vector<8x256xf32>
    %cst_14 = arith.constant dense<0.000000e+00> : vector<8xf32>
    %32 = vector.multi_reduction <add>, %31, %cst_14 [1] : vector<8x256xf32> to vector<8xf32>
    %33 = vector.shape_cast %32 : vector<8xf32> to vector<8x1xf32>
    %cst_15 = arith.constant 3.906250e-03 : f32
    %34 = vector.broadcast %cst_15 : f32 to vector<8x1xf32>
    %35 = arith.mulf %30, %34 : vector<8x1xf32>
    %cst_16 = arith.constant 3.906250e-03 : f32
    %36 = vector.broadcast %cst_16 : f32 to vector<8x1xf32>
    %37 = arith.mulf %33, %36 : vector<8x1xf32>
    %38 = arith.mulf %35, %35 : vector<8x1xf32>
    %39 = arith.subf %37, %38 : vector<8x1xf32>
    %40 = vector.broadcast %35 : vector<8x1xf32> to vector<8x256xf32>
    %41 = arith.subf %0, %40 : vector<8x256xf32>
    %cst_17 = arith.constant 9.99999974E-6 : f32
    %42 = vector.broadcast %cst_17 : f32 to vector<8x1xf32>
    %43 = arith.addf %39, %42 : vector<8x1xf32>
    %44 = math.rsqrt %43 : vector<8x1xf32>
    %45 = vector.broadcast %44 : vector<8x1xf32> to vector<8x256xf32>
    %46 = arith.mulf %41, %45 : vector<8x256xf32>
    %c0_18 = arith.constant 0 : index
    %c0_19 = arith.constant 0 : index
    %47 = vector.load %arg4[%c0_18, %c0_19] : memref<8x1xf32, #tpu.memory_space<vmem>>, vector<8x1xf32>
    %48 = vector.broadcast %47 : vector<8x1xf32> to vector<8x256xf32>
    %49 = arith.mulf %46, %48 : vector<8x256xf32>
    %c0_20 = arith.constant 0 : index
    %c0_21 = arith.constant 0 : index
    %50 = vector.load %arg5[%c0_20, %c0_21] : memref<8x1xf32, #tpu.memory_space<vmem>>, vector<8x1xf32>
    %51 = vector.broadcast %50 : vector<8x1xf32> to vector<8x256xf32>
    %52 = arith.addf %49, %51 : vector<8x256xf32>
    %cst_22 = arith.constant 0.000000e+00 : f32
    %53 = vector.broadcast %cst_22 : f32 to vector<8x256xf32>
    %54 = arith.maximumf %52, %53 : vector<8x256xf32>
    %c17_i32 = arith.constant 17 : i32
    %55 = tpu.dynamic_rotate %54 by %c17_i32 dim 1 : vector<8x256xf32>, i32 -> vector<8x256xf32>
    %c0_23 = arith.constant 0 : index
    %c0_24 = arith.constant 0 : index
    %56 = vector.load %arg11[%c0_23, %c0_24] : memref<9x256xf32, #tpu.memory_space<vmem>>, vector<1x256xf32>
    %57 = vector.broadcast %56 : vector<1x256xf32> to vector<8x256xf32>
    %58 = arith.mulf %55, %57 : vector<8x256xf32>
    %c16_i32 = arith.constant 16 : i32
    %59 = tpu.dynamic_rotate %54 by %c16_i32 dim 1 : vector<8x256xf32>, i32 -> vector<8x256xf32>
    %c1 = arith.constant 1 : index
    %c0_25 = arith.constant 0 : index
    %60 = vector.load %arg11[%c1, %c0_25] : memref<9x256xf32, #tpu.memory_space<vmem>>, vector<1x256xf32>
    %61 = vector.broadcast %60 : vector<1x256xf32> to vector<8x256xf32>
    %62 = arith.mulf %59, %61 : vector<8x256xf32>
    %c15_i32 = arith.constant 15 : i32
    %63 = tpu.dynamic_rotate %54 by %c15_i32 dim 1 : vector<8x256xf32>, i32 -> vector<8x256xf32>
    %c2 = arith.constant 2 : index
    %c0_26 = arith.constant 0 : index
    %64 = vector.load %arg11[%c2, %c0_26] : memref<9x256xf32, #tpu.memory_space<vmem>>, vector<1x256xf32>
    %65 = vector.broadcast %64 : vector<1x256xf32> to vector<8x256xf32>
    %66 = arith.mulf %63, %65 : vector<8x256xf32>
    %c1_i32 = arith.constant 1 : i32
    %67 = tpu.dynamic_rotate %54 by %c1_i32 dim 1 : vector<8x256xf32>, i32 -> vector<8x256xf32>
    %c3 = arith.constant 3 : index
    %c0_27 = arith.constant 0 : index
    %68 = vector.load %arg11[%c3, %c0_27] : memref<9x256xf32, #tpu.memory_space<vmem>>, vector<1x256xf32>
    %69 = vector.broadcast %68 : vector<1x256xf32> to vector<8x256xf32>
    %70 = arith.mulf %67, %69 : vector<8x256xf32>
    %c255_i32 = arith.constant 255 : i32
    %71 = tpu.dynamic_rotate %54 by %c255_i32 dim 1 : vector<8x256xf32>, i32 -> vector<8x256xf32>
    %c5 = arith.constant 5 : index
    %c0_28 = arith.constant 0 : index
    %72 = vector.load %arg11[%c5, %c0_28] : memref<9x256xf32, #tpu.memory_space<vmem>>, vector<1x256xf32>
    %73 = vector.broadcast %72 : vector<1x256xf32> to vector<8x256xf32>
    %74 = arith.mulf %71, %73 : vector<8x256xf32>
    %c241_i32 = arith.constant 241 : i32
    %75 = tpu.dynamic_rotate %54 by %c241_i32 dim 1 : vector<8x256xf32>, i32 -> vector<8x256xf32>
    %c6 = arith.constant 6 : index
    %c0_29 = arith.constant 0 : index
    %76 = vector.load %arg11[%c6, %c0_29] : memref<9x256xf32, #tpu.memory_space<vmem>>, vector<1x256xf32>
    %77 = vector.broadcast %76 : vector<1x256xf32> to vector<8x256xf32>
    %78 = arith.mulf %75, %77 : vector<8x256xf32>
    %c240_i32 = arith.constant 240 : i32
    %79 = tpu.dynamic_rotate %54 by %c240_i32 dim 1 : vector<8x256xf32>, i32 -> vector<8x256xf32>
    %c7 = arith.constant 7 : index
    %c0_30 = arith.constant 0 : index
    %80 = vector.load %arg11[%c7, %c0_30] : memref<9x256xf32, #tpu.memory_space<vmem>>, vector<1x256xf32>
    %81 = vector.broadcast %80 : vector<1x256xf32> to vector<8x256xf32>
    %82 = arith.mulf %79, %81 : vector<8x256xf32>
    %c239_i32 = arith.constant 239 : i32
    %83 = tpu.dynamic_rotate %54 by %c239_i32 dim 1 : vector<8x256xf32>, i32 -> vector<8x256xf32>
    %c8 = arith.constant 8 : index
    %c0_31 = arith.constant 0 : index
    %84 = vector.load %arg11[%c8, %c0_31] : memref<9x256xf32, #tpu.memory_space<vmem>>, vector<1x256xf32>
    %85 = vector.broadcast %84 : vector<1x256xf32> to vector<8x256xf32>
    %86 = arith.mulf %83, %85 : vector<8x256xf32>
    %87 = tpu.concatenate %58, %62, %66, %70, %54, %74, %78, %82, %86 in 0 : vector<8x256xf32>, vector<8x256xf32>, vector<8x256xf32>, vector<8x256xf32>, vector<8x256xf32>, vector<8x256xf32>, vector<8x256xf32>, vector<8x256xf32>, vector<8x256xf32> -> vector<72x256xf32>
    %c0_32 = arith.constant 0 : index
    %c0_33 = arith.constant 0 : index
    %88 = vector.load %arg9[%c0_32, %c0_33] : memref<8x72xf32, #tpu.memory_space<vmem>>, vector<8x72xf32>
    %cst_34 = arith.constant dense<0.000000e+00> : vector<8x256xf32>
    %89 = tpu.matmul %88, %87, %cst_34 {dimension_numbers = #tpu.dot_dimension_numbers<[1], [0], [0], [1], [0, 0, 1, 1], [], []>} : vector<8x72xf32>, vector<72x256xf32>, vector<8x256xf32> -> vector<8x256xf32>
    %cst_35 = arith.constant dense<0.000000e+00> : vector<8xf32>
    %90 = vector.multi_reduction <add>, %89, %cst_35 [1] : vector<8x256xf32> to vector<8xf32>
    %91 = vector.shape_cast %90 : vector<8xf32> to vector<8x1xf32>
    %92 = arith.mulf %89, %89 : vector<8x256xf32>
    %cst_36 = arith.constant dense<0.000000e+00> : vector<8xf32>
    %93 = vector.multi_reduction <add>, %92, %cst_36 [1] : vector<8x256xf32> to vector<8xf32>
    %94 = vector.shape_cast %93 : vector<8xf32> to vector<8x1xf32>
    %cst_37 = arith.constant 3.906250e-03 : f32
    %95 = vector.broadcast %cst_37 : f32 to vector<8x1xf32>
    %96 = arith.mulf %91, %95 : vector<8x1xf32>
    %cst_38 = arith.constant 3.906250e-03 : f32
    %97 = vector.broadcast %cst_38 : f32 to vector<8x1xf32>
    %98 = arith.mulf %94, %97 : vector<8x1xf32>
    %99 = arith.mulf %96, %96 : vector<8x1xf32>
    %100 = arith.subf %98, %99 : vector<8x1xf32>
    %101 = vector.broadcast %96 : vector<8x1xf32> to vector<8x256xf32>
    %102 = arith.subf %89, %101 : vector<8x256xf32>
    %cst_39 = arith.constant 9.99999974E-6 : f32
    %103 = vector.broadcast %cst_39 : f32 to vector<8x1xf32>
    %104 = arith.addf %100, %103 : vector<8x1xf32>
    %105 = math.rsqrt %104 : vector<8x1xf32>
    %106 = vector.broadcast %105 : vector<8x1xf32> to vector<8x256xf32>
    %107 = arith.mulf %102, %106 : vector<8x256xf32>
    %c0_40 = arith.constant 0 : index
    %c0_41 = arith.constant 0 : index
    %108 = vector.load %arg6[%c0_40, %c0_41] : memref<8x1xf32, #tpu.memory_space<vmem>>, vector<8x1xf32>
    %109 = vector.broadcast %108 : vector<8x1xf32> to vector<8x256xf32>
    %110 = arith.mulf %107, %109 : vector<8x256xf32>
    %c0_42 = arith.constant 0 : index
    %c0_43 = arith.constant 0 : index
    %111 = vector.load %arg7[%c0_42, %c0_43] : memref<8x1xf32, #tpu.memory_space<vmem>>, vector<8x1xf32>
    %112 = vector.broadcast %111 : vector<8x1xf32> to vector<8x256xf32>
    %113 = arith.addf %110, %112 : vector<8x256xf32>
    %cst_44 = arith.constant 0.000000e+00 : f32
    %114 = vector.broadcast %cst_44 : f32 to vector<8x256xf32>
    %115 = arith.maximumf %113, %114 : vector<8x256xf32>
    %c34_i32 = arith.constant 34 : i32
    %116 = tpu.dynamic_rotate %115 by %c34_i32 dim 1 : vector<8x256xf32>, i32 -> vector<8x256xf32>
    %c0_45 = arith.constant 0 : index
    %c0_46 = arith.constant 0 : index
    %117 = vector.load %arg12[%c0_45, %c0_46] : memref<9x256xf32, #tpu.memory_space<vmem>>, vector<1x256xf32>
    %118 = vector.broadcast %117 : vector<1x256xf32> to vector<8x256xf32>
    %119 = arith.mulf %116, %118 : vector<8x256xf32>
    %c32_i32 = arith.constant 32 : i32
    %120 = tpu.dynamic_rotate %115 by %c32_i32 dim 1 : vector<8x256xf32>, i32 -> vector<8x256xf32>
    %c1_47 = arith.constant 1 : index
    %c0_48 = arith.constant 0 : index
    %121 = vector.load %arg12[%c1_47, %c0_48] : memref<9x256xf32, #tpu.memory_space<vmem>>, vector<1x256xf32>
    %122 = vector.broadcast %121 : vector<1x256xf32> to vector<8x256xf32>
    %123 = arith.mulf %120, %122 : vector<8x256xf32>
    %c30_i32 = arith.constant 30 : i32
    %124 = tpu.dynamic_rotate %115 by %c30_i32 dim 1 : vector<8x256xf32>, i32 -> vector<8x256xf32>
    %c2_49 = arith.constant 2 : index
    %c0_50 = arith.constant 0 : index
    %125 = vector.load %arg12[%c2_49, %c0_50] : memref<9x256xf32, #tpu.memory_space<vmem>>, vector<1x256xf32>
    %126 = vector.broadcast %125 : vector<1x256xf32> to vector<8x256xf32>
    %127 = arith.mulf %124, %126 : vector<8x256xf32>
    %c2_i32 = arith.constant 2 : i32
    %128 = tpu.dynamic_rotate %115 by %c2_i32 dim 1 : vector<8x256xf32>, i32 -> vector<8x256xf32>
    %c3_51 = arith.constant 3 : index
    %c0_52 = arith.constant 0 : index
    %129 = vector.load %arg12[%c3_51, %c0_52] : memref<9x256xf32, #tpu.memory_space<vmem>>, vector<1x256xf32>
    %130 = vector.broadcast %129 : vector<1x256xf32> to vector<8x256xf32>
    %131 = arith.mulf %128, %130 : vector<8x256xf32>
    %c254_i32 = arith.constant 254 : i32
    %132 = tpu.dynamic_rotate %115 by %c254_i32 dim 1 : vector<8x256xf32>, i32 -> vector<8x256xf32>
    %c5_53 = arith.constant 5 : index
    %c0_54 = arith.constant 0 : index
    %133 = vector.load %arg12[%c5_53, %c0_54] : memref<9x256xf32, #tpu.memory_space<vmem>>, vector<1x256xf32>
    %134 = vector.broadcast %133 : vector<1x256xf32> to vector<8x256xf32>
    %135 = arith.mulf %132, %134 : vector<8x256xf32>
    %c226_i32 = arith.constant 226 : i32
    %136 = tpu.dynamic_rotate %115 by %c226_i32 dim 1 : vector<8x256xf32>, i32 -> vector<8x256xf32>
    %c6_55 = arith.constant 6 : index
    %c0_56 = arith.constant 0 : index
    %137 = vector.load %arg12[%c6_55, %c0_56] : memref<9x256xf32, #tpu.memory_space<vmem>>, vector<1x256xf32>
    %138 = vector.broadcast %137 : vector<1x256xf32> to vector<8x256xf32>
    %139 = arith.mulf %136, %138 : vector<8x256xf32>
    %c224_i32 = arith.constant 224 : i32
    %140 = tpu.dynamic_rotate %115 by %c224_i32 dim 1 : vector<8x256xf32>, i32 -> vector<8x256xf32>
    %c7_57 = arith.constant 7 : index
    %c0_58 = arith.constant 0 : index
    %141 = vector.load %arg12[%c7_57, %c0_58] : memref<9x256xf32, #tpu.memory_space<vmem>>, vector<1x256xf32>
    %142 = vector.broadcast %141 : vector<1x256xf32> to vector<8x256xf32>
    %143 = arith.mulf %140, %142 : vector<8x256xf32>
    %c222_i32 = arith.constant 222 : i32
    %144 = tpu.dynamic_rotate %115 by %c222_i32 dim 1 : vector<8x256xf32>, i32 -> vector<8x256xf32>
    %c8_59 = arith.constant 8 : index
    %c0_60 = arith.constant 0 : index
    %145 = vector.load %arg12[%c8_59, %c0_60] : memref<9x256xf32, #tpu.memory_space<vmem>>, vector<1x256xf32>
    %146 = vector.broadcast %145 : vector<1x256xf32> to vector<8x256xf32>
    %147 = arith.mulf %144, %146 : vector<8x256xf32>
    %148 = tpu.concatenate %119, %123, %127, %131, %115, %135, %139, %143, %147 in 0 : vector<8x256xf32>, vector<8x256xf32>, vector<8x256xf32>, vector<8x256xf32>, vector<8x256xf32>, vector<8x256xf32>, vector<8x256xf32>, vector<8x256xf32>, vector<8x256xf32> -> vector<72x256xf32>
    %c0_61 = arith.constant 0 : index
    %c0_62 = arith.constant 0 : index
    %149 = vector.load %arg10[%c0_61, %c0_62] : memref<8x72xf32, #tpu.memory_space<vmem>>, vector<8x72xf32>
    %cst_63 = arith.constant dense<0.000000e+00> : vector<8x256xf32>
    %150 = tpu.matmul %149, %148, %cst_63 {dimension_numbers = #tpu.dot_dimension_numbers<[1], [0], [0], [1], [0, 0, 1, 1], [], []>} : vector<8x72xf32>, vector<72x256xf32>, vector<8x256xf32> -> vector<8x256xf32>
    %151 = arith.addf %0, %28 : vector<8x256xf32>
    %152 = arith.addf %151, %150 : vector<8x256xf32>
    %c0_64 = arith.constant 0 : index
    %c0_65 = arith.constant 0 : index
    %153 = vector.load %arg13[%c0_64, %c0_65] : memref<8x256xf32, #tpu.memory_space<vmem>>, vector<8x256xf32>
    tpu.vector_store %arg13[%c0_64, %c0_65], %152 {strides = array<i32>} : memref<8x256xf32, #tpu.memory_space<vmem>>, vector<8x256xf32>,
    return
  }
  func.func @transform_0(%arg0: i32) -> (i32, i32) {
    %c0_i32 = arith.constant 0 : i32
    %c0_i32_0 = arith.constant 0 : i32
    return %arg0, %c0_i32 : i32, i32
  }
  func.func @transform_1(%arg0: i32) -> (i32, i32) {
    %c0_i32 = arith.constant 0 : i32
    %c0_i32_0 = arith.constant 0 : i32
    %c0_i32_1 = arith.constant 0 : i32
    return %c0_i32, %c0_i32_0 : i32, i32
  }
  func.func @transform_2(%arg0: i32) -> (i32, i32) {
    %c0_i32 = arith.constant 0 : i32
    %c0_i32_0 = arith.constant 0 : i32
    %c0_i32_1 = arith.constant 0 : i32
    return %c0_i32, %c0_i32_0 : i32, i32
  }
  func.func @transform_3(%arg0: i32) -> (i32, i32) {
    %c0_i32 = arith.constant 0 : i32
    %c0_i32_0 = arith.constant 0 : i32
    %c0_i32_1 = arith.constant 0 : i32
    return %c0_i32, %c0_i32_0 : i32, i32
  }
  func.func @transform_4(%arg0: i32) -> (i32, i32) {
    %c0_i32 = arith.constant 0 : i32
    %c0_i32_0 = arith.constant 0 : i32
    %c0_i32_1 = arith.constant 0 : i32
    return %c0_i32, %c0_i32_0 : i32, i32
  }
  func.func @transform_5(%arg0: i32) -> (i32, i32) {
    %c0_i32 = arith.constant 0 : i32
    %c0_i32_0 = arith.constant 0 : i32
    %c0_i32_1 = arith.constant 0 : i32
    return %c0_i32, %c0_i32_0 : i32, i32
  }
  func.func @transform_6(%arg0: i32) -> (i32, i32) {
    %c0_i32 = arith.constant 0 : i32
    %c0_i32_0 = arith.constant 0 : i32
    %c0_i32_1 = arith.constant 0 : i32
    return %c0_i32, %c0_i32_0 : i32, i32
  }
  func.func @transform_7(%arg0: i32) -> (i32, i32) {
    %c0_i32 = arith.constant 0 : i32
    %c0_i32_0 = arith.constant 0 : i32
    %c0_i32_1 = arith.constant 0 : i32
    return %c0_i32, %c0_i32_0 : i32, i32
  }
  func.func @transform_8(%arg0: i32) -> (i32, i32) {
    %c0_i32 = arith.constant 0 : i32
    %c0_i32_0 = arith.constant 0 : i32
    %c0_i32_1 = arith.constant 0 : i32
    return %c0_i32, %c0_i32_0 : i32, i32
  }
  func.func @transform_9(%arg0: i32) -> (i32, i32) {
    %c0_i32 = arith.constant 0 : i32
    %c0_i32_0 = arith.constant 0 : i32
    %c0_i32_1 = arith.constant 0 : i32
    return %c0_i32, %c0_i32_0 : i32, i32
  }
  func.func @transform_10(%arg0: i32) -> (i32, i32) {
    %c0_i32 = arith.constant 0 : i32
    %c0_i32_0 = arith.constant 0 : i32
    %c0_i32_1 = arith.constant 0 : i32
    return %c0_i32, %c0_i32_0 : i32, i32
  }
  func.func @transform_11(%arg0: i32) -> (i32, i32) {
    %c0_i32 = arith.constant 0 : i32
    %c0_i32_0 = arith.constant 0 : i32
    %c0_i32_1 = arith.constant 0 : i32
    return %c0_i32, %c0_i32_0 : i32, i32
  }
  func.func @transform_12(%arg0: i32) -> (i32, i32) {
    %c0_i32 = arith.constant 0 : i32
    %c0_i32_0 = arith.constant 0 : i32
    return %arg0, %c0_i32 : i32, i32
  }
}

</mosaic_0001>

<llo_original>
// kernel: tpu_custom_call.1
$region0: #{tpu_custom_call.1}
  #allocation0 [shape = 'u32[]', space=smem, size = 0x4, offset = 0x4, fixed_abs, tag = 'smem constant byte address 0x4 - core index']
  #allocation1 [shape = 'u32[144,128]{1,0:T(1,128)}', space=vmem, size = 0x12000, scoped, tag = 'internal scratch']
  %s0 = inlined_call_operand.hbm [shape: f32[8,256], index: 0, kind: input, shape index: {}]
  %s1 = inlined_call_operand.vmem [shape: f32[8,1], index: 1, kind: input, shape index: {}]
  %s2 = inlined_call_operand.vmem [shape: f32[8,1], index: 2, kind: input, shape index: {}]
  %s3 = inlined_call_operand.vmem [shape: f32[8,1], index: 3, kind: input, shape index: {}]
  %s4 = inlined_call_operand.vmem [shape: f32[8,1], index: 4, kind: input, shape index: {}]
  %s5 = inlined_call_operand.vmem [shape: f32[8,1], index: 5, kind: input, shape index: {}]
  %s6 = inlined_call_operand.vmem [shape: f32[8,1], index: 6, kind: input, shape index: {}]
  %s7 = inlined_call_operand.hbm [shape: f32[8,8], index: 7, kind: input, shape index: {}]
  %s8 = inlined_call_operand.hbm [shape: f32[8,72], index: 8, kind: input, shape index: {}]
  %s9 = inlined_call_operand.hbm [shape: f32[8,72], index: 9, kind: input, shape index: {}]
  %s10 = inlined_call_operand.vmem [shape: f32[9,256], index: 10, kind: input, shape index: {}]
  %s11 = inlined_call_operand.vmem [shape: f32[9,256], index: 11, kind: input, shape index: {}]
  %s12 = inlined_call_operand.hbm [shape: f32[8,256], index: 12, kind: output, shape index: {}]
  %s13 = sld [smem:[#allocation0]]
  $region74: #{tpu_custom_call.1} parent=0
    _
  %s15 = ssub.s32 1, %s13
  %s16 = scalar_select 0, %s15, %s13
  $region1: #{tpu_custom_call.1} parent=0
    #allocation2 [shape = 'u8[8192]{0}', space=vmem, size = 0x2000, scoped, tag = 'input window, operand 0, single buffered']
    #allocation3 [shape = 's32[1]{0}', space=sflag, size = 0x4, scoped, tag = 'scoped memory for tpu_custom_call.1']
    #allocation4 [shape = 's32[1]{0}', space=sflag, size = 0x4, scoped, tag = 'scoped memory for tpu_custom_call.1']
    #allocation5 [shape = 'u8[4096]{0}', space=vmem, size = 0x1000, scoped, tag = 'input window, operand 7, single buffered']
    #allocation6 [shape = 's32[1]{0}', space=sflag, size = 0x4, scoped, tag = 'scoped memory for tpu_custom_call.1']
    #allocation7 [shape = 'u8[4096]{0}', space=vmem, size = 0x1000, scoped, tag = 'input window, operand 8, single buffered']
    #allocation8 [shape = 'u8[4096]{0}', space=vmem, size = 0x1000, scoped, tag = 'input window, operand 9, single buffered']
    #allocation9 [shape = 's32[1]{0}', space=sflag, size = 0x4, scoped, tag = 'scoped memory for tpu_custom_call.1']
    #allocation10 [shape = 'u8[8192]{0}', space=vmem, size = 0x2000, scoped, tag = 'output window, operand 0, single buffered']
    %17 = vsyncpa [#allocation3], 0
    %18 = vsyncpa [#allocation6], 0
    %19 = vsyncpa [#allocation9], 0
    %20 = vsyncpa [#allocation4], 0
    // Predicated region
    $region2: #{tpu_custom_call.1} parent=1 // pred_check
      _
    $region3: #{tpu_custom_call.1} parent=1 // pred_check_branch
      %22 = sbr.rel (0) target = $region5
    $region4: #{tpu_custom_call.1} parent=1 // pred_region
      %s24 = ssub.s32 256, 256
      %25 = vsyncadd [#allocation3], %s24
      %s27 = sshll.u32 [#allocation2], 4
      %s28 = int_to_ptr.vmem [resolvable:$true] %s27
      %30 = dma.hbm_to_vmem [thread:$0]  %s0, 256, %s28, [#allocation3]
    $region5: #{tpu_custom_call.1} parent=1 // pred_fallthru
      _
    // Predicated region
    $region6: #{tpu_custom_call.1} parent=1 // pred_check
      _
    $region7: #{tpu_custom_call.1} parent=1 // pred_check_branch
      %32 = sbr.rel (0) target = $region9
    $region8: #{tpu_custom_call.1} parent=1 // pred_region
      _
    $region9: #{tpu_custom_call.1} parent=1 // pred_fallthru
      _
    // Predicated region
    $region10: #{tpu_custom_call.1} parent=1 // pred_check
      _
    $region11: #{tpu_custom_call.1} parent=1 // pred_check_branch
      %34 = sbr.rel (0) target = $region13
    $region12: #{tpu_custom_call.1} parent=1 // pred_region
      _
    $region13: #{tpu_custom_call.1} parent=1 // pred_fallthru
      _
    // Predicated region
    $region14: #{tpu_custom_call.1} parent=1 // pred_check
      _
    $region15: #{tpu_custom_call.1} parent=1 // pred_check_branch
      %36 = sbr.rel (0) target = $region17
    $region16: #{tpu_custom_call.1} parent=1 // pred_region
      _
    $region17: #{tpu_custom_call.1} parent=1 // pred_fallthru
      _
    // Predicated region
    $region18: #{tpu_custom_call.1} parent=1 // pred_check
      _
    $region19: #{tpu_custom_call.1} parent=1 // pred_check_branch
      %38 = sbr.rel (0) target = $region21
    $region20: #{tpu_custom_call.1} parent=1 // pred_region
      _
    $region21: #{tpu_custom_call.1} parent=1 // pred_fallthru
      _
    // Predicated region
    $region22: #{tpu_custom_call.1} parent=1 // pred_check
      _
    $region23: #{tpu_custom_call.1} parent=1 // pred_check_branch
      %40 = sbr.rel (0) target = $region25
    $region24: #{tpu_custom_call.1} parent=1 // pred_region
      _
    $region25: #{tpu_custom_call.1} parent=1 // pred_fallthru
      _
    // Predicated region
    $region26: #{tpu_custom_call.1} parent=1 // pred_check
      _
    $region27: #{tpu_custom_call.1} parent=1 // pred_check_branch
      %42 = sbr.rel (0) target = $region29
    $region28: #{tpu_custom_call.1} parent=1 // pred_region
      _
    $region29: #{tpu_custom_call.1} parent=1 // pred_fallthru
      _
    // Predicated region
    $region30: #{tpu_custom_call.1} parent=1 // pred_check
      _
    $region31: #{tpu_custom_call.1} parent=1 // pred_check_branch
      %44 = sbr.rel (0) target = $region33
    $region32: #{tpu_custom_call.1} parent=1 // pred_region
      %s46 = ssub.s32 128, 128
      %47 = vsyncadd [#allocation6], %s46
      %s49 = sshll.u32 [#allocation5], 4
      %s50 = int_to_ptr.vmem [resolvable:$true] %s49
      %52 = dma.hbm_to_vmem [thread:$0]  %s7, 128, %s50, [#allocation6]
    $region33: #{tpu_custom_call.1} parent=1 // pred_fallthru
      _
    // Predicated region
    $region34: #{tpu_custom_call.1} parent=1 // pred_check
      _
    $region35: #{tpu_custom_call.1} parent=1 // pred_check_branch
      %54 = sbr.rel (0) target = $region37
    $region36: #{tpu_custom_call.1} parent=1 // pred_region
      %s56 = ssub.s32 128, 128
      %57 = vsyncadd [#allocation6], %s56
      %s59 = sshll.u32 [#allocation7], 4
      %s60 = int_to_ptr.vmem [resolvable:$true] %s59
      %62 = dma.hbm_to_vmem [thread:$0]  %s8, 128, %s60, [#allocation6]
    $region37: #{tpu_custom_call.1} parent=1 // pred_fallthru
      _
    // Predicated region
    $region38: #{tpu_custom_call.1} parent=1 // pred_check
      _
    $region39: #{tpu_custom_call.1} parent=1 // pred_check_branch
      %64 = sbr.rel (0) target = $region41
    $region40: #{tpu_custom_call.1} parent=1 // pred_region
      %s66 = ssub.s32 128, 128
      %67 = vsyncadd [#allocation9], %s66
      %s69 = sshll.u32 [#allocation8], 4
      %s70 = int_to_ptr.vmem [resolvable:$true] %s69
      %72 = dma.hbm_to_vmem [thread:$0]  %s9, 128, %s70, [#allocation9]
    $region41: #{tpu_custom_call.1} parent=1 // pred_fallthru
      _
    // Predicated region
    $region42: #{tpu_custom_call.1} parent=1 // pred_check
      _
    $region43: #{tpu_custom_call.1} parent=1 // pred_check_branch
      %74 = sbr.rel (0) target = $region45
    $region44: #{tpu_custom_call.1} parent=1 // pred_region
      _
    $region45: #{tpu_custom_call.1} parent=1 // pred_fallthru
      _
    // Predicated region
    $region46: #{tpu_custom_call.1} parent=1 // pred_check
      _
    $region47: #{tpu_custom_call.1} parent=1 // pred_check_branch
      %76 = sbr.rel (0) target = $region49
    $region48: #{tpu_custom_call.1} parent=1 // pred_region
      _
    $region49: #{tpu_custom_call.1} parent=1 // pred_fallthru
      _
    // Predicated region
    $region50: #{tpu_custom_call.1} parent=1 // pred_check
      _
    $region51: #{tpu_custom_call.1} parent=1 // pred_check_branch
      %78 = sbr.rel (0) target = $region53
    $region52: #{tpu_custom_call.1} parent=1 // pred_region
      %79 = dma.done [#allocation3], 256
    $region53: #{tpu_custom_call.1} parent=1 // pred_fallthru
      _
    // Predicated region
    $region54: #{tpu_custom_call.1} parent=1 // pred_check
      _
    $region55: #{tpu_custom_call.1} parent=1 // pred_check_branch
      %81 = sbr.rel (0) target = $region57
    $region56: #{tpu_custom_call.1} parent=1 // pred_region
      %82 = dma.done [#allocation6], 128
    $region57: #{tpu_custom_call.1} parent=1 // pred_fallthru
      _
    // Predicated region
    $region58: #{tpu_custom_call.1} parent=1 // pred_check
      _
    $region59: #{tpu_custom_call.1} parent=1 // pred_check_branch
      %84 = sbr.rel (0) target = $region61
    $region60: #{tpu_custom_call.1} parent=1 // pred_region
      %85 = dma.done [#allocation6], 128
    $region61: #{tpu_custom_call.1} parent=1 // pred_fallthru
      _
    // Predicated region
    $region62: #{tpu_custom_call.1} parent=1 // pred_check
      _
    $region63: #{tpu_custom_call.1} parent=1 // pred_check_branch
      %87 = sbr.rel (0) target = $region65
    $region64: #{tpu_custom_call.1} parent=1 // pred_region
      %88 = dma.done [#allocation9], 128
    $region65: #{tpu_custom_call.1} parent=1 // pred_fallthru
      _
    %v89 = vld [vmem:[#allocation2] sm:$0xff]
    %v90 = vld [vmem:[#allocation2 + $0x8] sm:$0xff]
    %v91 = vadd.f32 %v89, %v90
    %92 = vadd.xlane.f32.xlu0 %v91
    %v93 = vpop.xlane.xlu0 %92
    %v94 = vmul.f32 %v89, %v89
    %v95 = vmul.f32 %v90, %v90
    %v96 = vadd.f32 %v94, %v95
    %97 = vadd.xlane.f32.xlu0 %v96
    %v98 = vpop.xlane.xlu0 %97
    %v99 = vmul.f32 %v93, 0.00390625
    %v100 = vmul.f32 %v98, 0.00390625
    %v101 = vmul.f32 %v99, %v99
    %v102 = vsub.f32 %v100, %v101
    %v103 = vsub.f32 %v89, %v99
    %v104 = vsub.f32 %v90, %v99
    %v105 = vadd.f32 %v102, 1e-05
    %v106 = vrsqrt.pop %v105
    %v107 = vmul.f32 %v103, %v106
    %v108 = vmul.f32 %v104, %v106
    %v109 = vld [vmem:[%s1] sm:$0xff]
    %111 = vset.pattern.permute.xlu0 0
    %112 = vperm.xlu0 %111, %v109
    %v113 = vpop.permute.xlu0 %112
    %v115 = vmul.f32 %v107, %v113
    %v116 = vmul.f32 %v108, %v113
    %v117 = vld [vmem:[%s2] sm:$0xff]
    %119 = vset.pattern.permute.xlu0 0
    %120 = vperm.xlu0 %119, %v117
    %v121 = vpop.permute.xlu0 %120
    %v123 = vadd.f32 %v115, %v121
    %v124 = vadd.f32 %v116, %v121
    %v125 = vmax.f32 %v123, 0.0
    %v126 = vmax.f32 %v124, 0.0
    %v127 = vld [vmem:[#allocation5] sm:$0xff]
    %vm128 = vcmask 64512
    %v130 = vsel %vm128, %v127, 0
    %132 = vmatprep.subr.mxu0 0.0
    %133 = vmatpush1.msra.mxu0 0.0
    %134 = vmatprep.subr.mxu0 0.0
    %135 = vmatpush1.msra.mxu0 0.0
    %136 = vmatprep.subr.mxu0 0.0
    %137 = vmatpush1.msra.mxu0 0.0
    %138 = vmatprep.subr.mxu0 0.0
    %139 = vmatpush1.msra.mxu0 0.0
    %140 = vmatprep.subr.mxu0 0.0
    %141 = vmatpush1.msra.mxu0 0.0
    %142 = vmatprep.subr.mxu0 0.0
    %143 = vmatpush1.msra.mxu0 0.0
    %144 = vmatprep.subr.mxu0 0.0
    %145 = vmatpush1.msra.mxu0 0.0
    %146 = vmatprep.subr.mxu0 0.0
    %147 = vmatpush1.msra.mxu0 0.0
    %148 = vmatprep.subr.mxu0 0.0
    %149 = vmatpush1.msra.mxu0 0.0
    %150 = vmatprep.subr.mxu0 0.0
    %151 = vmatpush1.msra.mxu0 0.0
    %152 = vmatprep.subr.mxu0 0.0
    %153 = vmatpush1.msra.mxu0 0.0
    %154 = vmatprep.subr.mxu0 0.0
    %155 = vmatpush1.msra.mxu0 0.0
    %156 = vmatprep.subr.mxu0 0.0
    %157 = vmatpush1.msra.mxu0 0.0
    %158 = vmatprep.subr.mxu0 0.0
    %159 = vmatpush1.msra.mxu0 0.0
    %160 = vmatprep.subr.mxu0 0.0
    %161 = vmatpush1.msra.mxu0 0.0
    %162 = vmatprep.subr.mxu0 %v126
    %163 = vmatpush1.msra.mxu0 %v125
    %164 = vmatprep.subr.mxu0 0.0
    %165 = vmatpush2.msra.mxu0 0.0
    %166 = vmatprep.subr.mxu0 0.0
    %167 = vmatpush2.msra.mxu0 0.0
    %168 = vmatprep.subr.mxu0 0.0
    %169 = vmatpush2.msra.mxu0 0.0
    %170 = vmatprep.subr.mxu0 0.0
    %171 = vmatpush2.msra.mxu0 0.0
    %172 = vmatprep.subr.mxu0 0.0
    %173 = vmatpush2.msra.mxu0 0.0
    %174 = vmatprep.subr.mxu0 0.0
    %175 = vmatpush2.msra.mxu0 0.0
    %176 = vmatprep.subr.mxu0 0.0
    %177 = vmatpush2.msra.mxu0 0.0
    %178 = vmatprep.subr.mxu0 0.0
    %179 = vmatpush2.msra.mxu0 0.0
    %180 = vmatprep.subr.mxu0 0.0
    %181 = vmatpush2.msra.mxu0 0.0
    %182 = vmatprep.subr.mxu0 0.0
    %183 = vmatpush2.msra.mxu0 0.0
    %184 = vmatprep.subr.mxu0 0.0
    %185 = vmatpush2.msra.mxu0 0.0
    %186 = vmatprep.subr.mxu0 0.0
    %187 = vmatpush2.msra.mxu0 0.0
    %188 = vmatprep.subr.mxu0 0.0
    %189 = vmatpush2.msra.mxu0 0.0
    %190 = vmatprep.subr.mxu0 0.0
    %191 = vmatpush2.msra.mxu0 0.0
    %192 = vmatprep.subr.mxu0 0.0
    %193 = vmatpush2.msra.mxu0 0.0
    %194 = vmatprep.subr.mxu0 0.0
    %195 = vmatpush2.msra.mxu0 0.0
    %196 = vmatprep.mubr.f32.mxu0 0.0
    %197 = vmatmul.mubr.f32.gmra.mxu0 %v130
    %v198 = vpop.f32.mrf.mxu0
    %v199 = vadd.f32 0.0, %v198
    %v200 = vpop.f32.mrf.mxu0
    %v201 = vadd.f32 0.0, %v200
    %202 = vdwg.mxu0
    %v203 = vld [vmem:[%s3] sm:$0xff]
    %205 = vset.pattern.permute.xlu0 0
    %206 = vperm.xlu0 %205, %v203
    %v207 = vpop.permute.xlu0 %206
    %v209 = vmul.f32 %v107, %v207
    %v210 = vmul.f32 %v108, %v207
    %v211 = vld [vmem:[%s4] sm:$0xff]
    %213 = vset.pattern.permute.xlu0 0
    %214 = vperm.xlu0 %213, %v211
    %v215 = vpop.permute.xlu0 %214
    %v217 = vadd.f32 %v209, %v215
    %v218 = vadd.f32 %v210, %v215
    %v219 = vmax.f32 %v217, 0.0
    %v220 = vmax.f32 %v218, 0.0
    %221 = vrot.lane.b32.xlu0 %v219, 17
    %v222 = vpop.permute.xlu0 %221
    %223 = vrot.lane.b32.xlu0 %v220, 17
    %v224 = vpop.permute.xlu0 %223
    %v225 = vlaneseq
    %v226 = vand.u32 %v225, 127
    %vm227 = vcmp.lt.s32.totalorder %v226, 17
    %v228 = vsel %vm227, %v222, %v224
    %v229 = vsel %vm227, %v224, %v222
    %v230 = vld [vmem:[%s10] ss:$8 sm:$0x3]
    %v232 = vlaneseq
    %v233 = vshrl.u32 %v232, 7
    %v234 = vsub.s32 0, %v233
    %v235 = vrot.slane %v230, %v234
    %v236 = vlaneseq
    %v237 = vshrl.u32 %v236, 7
    %v238 = vsub.s32 1, %v237
    %v239 = vrot.slane %v230, %v238
    %v242 = vmul.f32 %v229, %v235
    %v243 = vmul.f32 %v228, %v239
    %244 = vrot.lane.b32.xlu0 %v219, 16
    %v245 = vpop.permute.xlu0 %244
    %246 = vrot.lane.b32.xlu0 %v220, 16
    %v247 = vpop.permute.xlu0 %246
    %vm248 = vcmp.lt.s32.totalorder %v226, 16
    %v249 = vsel %vm248, %v245, %v247
    %v250 = vsel %vm248, %v247, %v245
    %s251 = scalar_lea.vmem %s10, 1
    %v252 = vld [vmem:[%s251] ss:$8 sm:$0x3]
    %v254 = vlaneseq
    %v255 = vshrl.u32 %v254, 7
    %v256 = vsub.s32 0, %v255
    %v257 = vrot.slane %v252, %v256
    %v258 = vlaneseq
    %v259 = vshrl.u32 %v258, 7
    %v260 = vsub.s32 1, %v259
    %v261 = vrot.slane %v252, %v260
    %v264 = vmul.f32 %v250, %v257
    %v265 = vmul.f32 %v249, %v261
    %266 = vrot.lane.b32.xlu0 %v219, 15
    %v267 = vpop.permute.xlu0 %266
    %268 = vrot.lane.b32.xlu0 %v220, 15
    %v269 = vpop.permute.xlu0 %268
    %vm270 = vcmp.lt.s32.totalorder %v226, 15
    %v271 = vsel %vm270, %v267, %v269
    %v272 = vsel %vm270, %v269, %v267
    %s273 = scalar_lea.vmem %s10, 2
    %v274 = vld [vmem:[%s273] ss:$8 sm:$0x3]
    %v276 = vlaneseq
    %v277 = vshrl.u32 %v276, 7
    %v278 = vsub.s32 0, %v277
    %v279 = vrot.slane %v274, %v278
    %v280 = vlaneseq
    %v281 = vshrl.u32 %v280, 7
    %v282 = vsub.s32 1, %v281
    %v283 = vrot.slane %v274, %v282
    %v286 = vmul.f32 %v272, %v279
    %v287 = vmul.f32 %v271, %v283
    %288 = vrot.lane.b32.xlu0 %v219, 1
    %v289 = vpop.permute.xlu0 %288
    %290 = vrot.lane.b32.xlu0 %v220, 1
    %v291 = vpop.permute.xlu0 %290
    %vm292 = vcmp.lt.s32.totalorder %v226, 1
    %v293 = vsel %vm292, %v289, %v291
    %v294 = vsel %vm292, %v291, %v289
    %s295 = scalar_lea.vmem %s10, 3
    %v296 = vld [vmem:[%s295] ss:$8 sm:$0x3]
    %v298 = vlaneseq
    %v299 = vshrl.u32 %v298, 7
    %v300 = vsub.s32 0, %v299
    %v301 = vrot.slane %v296, %v300
    %v302 = vlaneseq
    %v303 = vshrl.u32 %v302, 7
    %v304 = vsub.s32 1, %v303
    %v305 = vrot.slane %v296, %v304
    %v308 = vmul.f32 %v294, %v301
    %v309 = vmul.f32 %v293, %v305
    %310 = vrot.lane.b32.xlu0 %v219, 127
    %v311 = vpop.permute.xlu0 %310
    %312 = vrot.lane.b32.xlu0 %v220, 127
    %v313 = vpop.permute.xlu0 %312
    %vm314 = vcmp.lt.s32.totalorder %v226, 127
    %v315 = vsel %vm314, %v311, %v313
    %v316 = vsel %vm314, %v313, %v311
    %s317 = scalar_lea.vmem %s10, 5
    %v318 = vld [vmem:[%s317] ss:$8 sm:$0x3]
    %v320 = vlaneseq
    %v321 = vshrl.u32 %v320, 7
    %v322 = vsub.s32 0, %v321
    %v323 = vrot.slane %v318, %v322
    %v324 = vlaneseq
    %v325 = vshrl.u32 %v324, 7
    %v326 = vsub.s32 1, %v325
    %v327 = vrot.slane %v318, %v326
    %v330 = vmul.f32 %v315, %v323
    %v331 = vmul.f32 %v316, %v327
    %332 = vrot.lane.b32.xlu0 %v219, 113
    %v333 = vpop.permute.xlu0 %332
    %334 = vrot.lane.b32.xlu0 %v220, 113
    %v335 = vpop.permute.xlu0 %334
    %vm336 = vcmp.lt.s32.totalorder %v226, 113
    %v337 = vsel %vm336, %v333, %v335
    %v338 = vsel %vm336, %v335, %v333
    %s339 = scalar_lea.vmem %s10, 6
    %v340 = vld [vmem:[%s339] ss:$8 sm:$0x3]
    %v342 = vlaneseq
    %v343 = vshrl.u32 %v342, 7
    %v344 = vsub.s32 0, %v343
    %v345 = vrot.slane %v340, %v344
    %v346 = vlaneseq
    %v347 = vshrl.u32 %v346, 7
    %v348 = vsub.s32 1, %v347
    %v349 = vrot.slane %v340, %v348
    %v352 = vmul.f32 %v337, %v345
    %v353 = vmul.f32 %v338, %v349
    %354 = vrot.lane.b32.xlu0 %v219, 112
    %v355 = vpop.permute.xlu0 %354
    %356 = vrot.lane.b32.xlu0 %v220, 112
    %v357 = vpop.permute.xlu0 %356
    %vm358 = vcmp.lt.s32.totalorder %v226, 112
    %v359 = vsel %vm358, %v355, %v357
    %v360 = vsel %vm358, %v357, %v355
    %s361 = scalar_lea.vmem %s10, 7
    %v362 = vld [vmem:[%s361] ss:$8 sm:$0x3]
    %v364 = vlaneseq
    %v365 = vshrl.u32 %v364, 7
    %v366 = vsub.s32 0, %v365
    %v367 = vrot.slane %v362, %v366
    %v368 = vlaneseq
    %v369 = vshrl.u32 %v368, 7
    %v370 = vsub.s32 1, %v369
    %v371 = vrot.slane %v362, %v370
    %v374 = vmul.f32 %v359, %v367
    %v375 = vmul.f32 %v360, %v371
    %376 = vrot.lane.b32.xlu0 %v219, 111
    %v377 = vpop.permute.xlu0 %376
    %378 = vrot.lane.b32.xlu0 %v220, 111
    %v379 = vpop.permute.xlu0 %378
    %vm380 = vcmp.lt.s32.totalorder %v226, 111
    %v381 = vsel %vm380, %v377, %v379
    %v382 = vsel %vm380, %v379, %v377
    %s383 = scalar_lea.vmem %s10, 16
    %v384 = vld [vmem:[%s383] ss:$8 sm:$0x3]
    %v386 = vlaneseq
    %v387 = vshrl.u32 %v386, 7
    %v388 = vsub.s32 0, %v387
    %v389 = vrot.slane %v384, %v388
    %v390 = vlaneseq
    %v391 = vshrl.u32 %v390, 7
    %v392 = vsub.s32 1, %v391
    %v393 = vrot.slane %v384, %v392
    %v396 = vmul.f32 %v381, %v389
    %v397 = vmul.f32 %v382, %v393
    %v398 = vld [vmem:[#allocation7] sm:$0xff]
    %vm399 = vcmask 588800
    %v401 = vsel %vm399, %v398, 0
    %403 = vmatprep.subr.mxu0 0.0
    %404 = vmatpush1.msra.mxu0 0.0
    %405 = vmatprep.subr.mxu0 0.0
    %406 = vmatpush1.msra.mxu0 0.0
    %407 = vmatprep.subr.mxu0 0.0
    %408 = vmatpush1.msra.mxu0 0.0
    %409 = vmatprep.subr.mxu0 0.0
    %410 = vmatpush1.msra.mxu0 0.0
    %411 = vmatprep.subr.mxu0 0.0
    %412 = vmatpush1.msra.mxu0 0.0
    %413 = vmatprep.subr.mxu0 0.0
    %414 = vmatpush1.msra.mxu0 0.0
    %415 = vmatprep.subr.mxu0 0.0
    %416 = vmatpush1.msra.mxu0 0.0
    %417 = vmatprep.subr.mxu0 %v397
    %418 = vmatpush1.msra.mxu0 %v396
    %419 = vmatprep.subr.mxu0 %v375
    %420 = vmatpush1.msra.mxu0 %v374
    %421 = vmatprep.subr.mxu0 %v353
    %422 = vmatpush1.msra.mxu0 %v352
    %423 = vmatprep.subr.mxu0 %v331
    %424 = vmatpush1.msra.mxu0 %v330
    %425 = vmatprep.subr.mxu0 %v220
    %426 = vmatpush1.msra.mxu0 %v219
    %427 = vmatprep.subr.mxu0 %v309
    %428 = vmatpush1.msra.mxu0 %v308
    %429 = vmatprep.subr.mxu0 %v287
    %430 = vmatpush1.msra.mxu0 %v286
    %431 = vmatprep.subr.mxu0 %v265
    %432 = vmatpush1.msra.mxu0 %v264
    %433 = vmatprep.subr.mxu0 %v243
    %434 = vmatpush1.msra.mxu0 %v242
    %435 = vmatprep.subr.mxu0 0.0
    %436 = vmatpush2.msra.mxu0 0.0
    %437 = vmatprep.subr.mxu0 0.0
    %438 = vmatpush2.msra.mxu0 0.0
    %439 = vmatprep.subr.mxu0 0.0
    %440 = vmatpush2.msra.mxu0 0.0
    %441 = vmatprep.subr.mxu0 0.0
    %442 = vmatpush2.msra.mxu0 0.0
    %443 = vmatprep.subr.mxu0 0.0
    %444 = vmatpush2.msra.mxu0 0.0
    %445 = vmatprep.subr.mxu0 0.0
    %446 = vmatpush2.msra.mxu0 0.0
    %447 = vmatprep.subr.mxu0 0.0
    %448 = vmatpush2.msra.mxu0 0.0
    %449 = vmatprep.subr.mxu0 0.0
    %450 = vmatpush2.msra.mxu0 0.0
    %451 = vmatprep.subr.mxu0 0.0
    %452 = vmatpush2.msra.mxu0 0.0
    %453 = vmatprep.subr.mxu0 0.0
    %454 = vmatpush2.msra.mxu0 0.0
    %455 = vmatprep.subr.mxu0 0.0
    %456 = vmatpush2.msra.mxu0 0.0
    %457 = vmatprep.subr.mxu0 0.0
    %458 = vmatpush2.msra.mxu0 0.0
    %459 = vmatprep.subr.mxu0 0.0
    %460 = vmatpush2.msra.mxu0 0.0
    %461 = vmatprep.subr.mxu0 0.0
    %462 = vmatpush2.msra.mxu0 0.0
    %463 = vmatprep.subr.mxu0 0.0
    %464 = vmatpush2.msra.mxu0 0.0
    %465 = vmatprep.subr.mxu0 0.0
    %466 = vmatpush2.msra.mxu0 0.0
    %467 = vmatprep.mubr.f32.mxu0 0.0
    %468 = vmatmul.mubr.f32.gmra.mxu0 %v401
    %v469 = vpop.f32.mrf.mxu0
    %v470 = vadd.f32 0.0, %v469
    %v471 = vpop.f32.mrf.mxu0
    %v472 = vadd.f32 0.0, %v471
    %473 = vdwg.mxu0
    %v474 = vadd.f32 %v470, %v472
    %475 = vadd.xlane.f32.xlu0 %v474
    %v476 = vpop.xlane.xlu0 %475
    %v477 = vmul.f32 %v470, %v470
    %v478 = vmul.f32 %v472, %v472
    %v479 = vadd.f32 %v477, %v478
    %480 = vadd.xlane.f32.xlu0 %v479
    %v481 = vpop.xlane.xlu0 %480
    %v482 = vmul.f32 %v476, 0.00390625
    %v483 = vmul.f32 %v481, 0.00390625
    %v484 = vmul.f32 %v482, %v482
    %v485 = vsub.f32 %v483, %v484
    %v486 = vsub.f32 %v470, %v482
    %v487 = vsub.f32 %v472, %v482
    %v488 = vadd.f32 %v485, 1e-05
    %v489 = vrsqrt.pop %v488
    %v490 = vmul.f32 %v486, %v489
    %v491 = vmul.f32 %v487, %v489
    %v492 = vld [vmem:[%s5] sm:$0xff]
    %494 = vset.pattern.permute.xlu0 0
    %495 = vperm.xlu0 %494, %v492
    %v496 = vpop.permute.xlu0 %495
    %v498 = vmul.f32 %v490, %v496
    %v499 = vmul.f32 %v491, %v496
    %v500 = vld [vmem:[%s6] sm:$0xff]
    %502 = vset.pattern.permute.xlu0 0
    %503 = vperm.xlu0 %502, %v500
    %v504 = vpop.permute.xlu0 %503
    %v506 = vadd.f32 %v498, %v504
    %v507 = vadd.f32 %v499, %v504
    %v508 = vmax.f32 %v506, 0.0
    %v509 = vmax.f32 %v507, 0.0
    %510 = vrot.lane.b32.xlu0 %v508, 34
    %v511 = vpop.permute.xlu0 %510
    %512 = vrot.lane.b32.xlu0 %v509, 34
    %v513 = vpop.permute.xlu0 %512
    %vm514 = vcmp.lt.s32.totalorder %v226, 34
    %v515 = vsel %vm514, %v511, %v513
    %v516 = vsel %vm514, %v513, %v511
    %v517 = vld [vmem:[%s11] ss:$8 sm:$0x3]
    %v519 = vlaneseq
    %v520 = vshrl.u32 %v519, 7
    %v521 = vsub.s32 0, %v520
    %v522 = vrot.slane %v517, %v521
    %v523 = vlaneseq
    %v524 = vshrl.u32 %v523, 7
    %v525 = vsub.s32 1, %v524
    %v526 = vrot.slane %v517, %v525
    %v529 = vmul.f32 %v516, %v522
    %v530 = vmul.f32 %v515, %v526
    %531 = vrot.lane.b32.xlu0 %v508, 32
    %v532 = vpop.permute.xlu0 %531
    %533 = vrot.lane.b32.xlu0 %v509, 32
    %v534 = vpop.permute.xlu0 %533
    %vm535 = vcmp.lt.s32.totalorder %v226, 32
    %v536 = vsel %vm535, %v532, %v534
    %v537 = vsel %vm535, %v534, %v532
    %s538 = scalar_lea.vmem %s11, 1
    %v539 = vld [vmem:[%s538] ss:$8 sm:$0x3]
    %v541 = vlaneseq
    %v542 = vshrl.u32 %v541, 7
    %v543 = vsub.s32 0, %v542
    %v544 = vrot.slane %v539, %v543
    %v545 = vlaneseq
    %v546 = vshrl.u32 %v545, 7
    %v547 = vsub.s32 1, %v546
    %v548 = vrot.slane %v539, %v547
    %v551 = vmul.f32 %v537, %v544
    %v552 = vmul.f32 %v536, %v548
    %553 = vrot.lane.b32.xlu0 %v508, 30
    %v554 = vpop.permute.xlu0 %553
    %555 = vrot.lane.b32.xlu0 %v509, 30
    %v556 = vpop.permute.xlu0 %555
    %vm557 = vcmp.lt.s32.totalorder %v226, 30
    %v558 = vsel %vm557, %v554, %v556
    %v559 = vsel %vm557, %v556, %v554
    %s560 = scalar_lea.vmem %s11, 2
    %v561 = vld [vmem:[%s560] ss:$8 sm:$0x3]
    %v563 = vlaneseq
    %v564 = vshrl.u32 %v563, 7
    %v565 = vsub.s32 0, %v564
    %v566 = vrot.slane %v561, %v565
    %v567 = vlaneseq
    %v568 = vshrl.u32 %v567, 7
    %v569 = vsub.s32 1, %v568
    %v570 = vrot.slane %v561, %v569
    %v573 = vmul.f32 %v559, %v566
    %v574 = vmul.f32 %v558, %v570
    %575 = vrot.lane.b32.xlu0 %v508, 2
    %v576 = vpop.permute.xlu0 %575
    %577 = vrot.lane.b32.xlu0 %v509, 2
    %v578 = vpop.permute.xlu0 %577
    %vm579 = vcmp.lt.s32.totalorder %v226, 2
    %v580 = vsel %vm579, %v576, %v578
    %v581 = vsel %vm579, %v578, %v576
    %s582 = scalar_lea.vmem %s11, 3
    %v583 = vld [vmem:[%s582] ss:$8 sm:$0x3]
    %v585 = vlaneseq
    %v586 = vshrl.u32 %v585, 7
    %v587 = vsub.s32 0, %v586
    %v588 = vrot.slane %v583, %v587
    %v589 = vlaneseq
    %v590 = vshrl.u32 %v589, 7
    %v591 = vsub.s32 1, %v590
    %v592 = vrot.slane %v583, %v591
    %v595 = vmul.f32 %v581, %v588
    %v596 = vmul.f32 %v580, %v592
    %597 = vrot.lane.b32.xlu0 %v508, 126
    %v598 = vpop.permute.xlu0 %597
    %599 = vrot.lane.b32.xlu0 %v509, 126
    %v600 = vpop.permute.xlu0 %599
    %vm601 = vcmp.lt.s32.totalorder %v226, 126
    %v602 = vsel %vm601, %v598, %v600
    %v603 = vsel %vm601, %v600, %v598
    %s604 = scalar_lea.vmem %s11, 5
    %v605 = vld [vmem:[%s604] ss:$8 sm:$0x3]
    %v607 = vlaneseq
    %v608 = vshrl.u32 %v607, 7
    %v609 = vsub.s32 0, %v608
    %v610 = vrot.slane %v605, %v609
    %v611 = vlaneseq
    %v612 = vshrl.u32 %v611, 7
    %v613 = vsub.s32 1, %v612
    %v614 = vrot.slane %v605, %v613
    %v617 = vmul.f32 %v602, %v610
    %v618 = vmul.f32 %v603, %v614
    %619 = vrot.lane.b32.xlu0 %v508, 98
    %v620 = vpop.permute.xlu0 %619
    %621 = vrot.lane.b32.xlu0 %v509, 98
    %v622 = vpop.permute.xlu0 %621
    %vm623 = vcmp.lt.s32.totalorder %v226, 98
    %v624 = vsel %vm623, %v620, %v622
    %v625 = vsel %vm623, %v622, %v620
    %s626 = scalar_lea.vmem %s11, 6
    %v627 = vld [vmem:[%s626] ss:$8 sm:$0x3]
    %v629 = vlaneseq
    %v630 = vshrl.u32 %v629, 7
    %v631 = vsub.s32 0, %v630
    %v632 = vrot.slane %v627, %v631
    %v633 = vlaneseq
    %v634 = vshrl.u32 %v633, 7
    %v635 = vsub.s32 1, %v634
    %v636 = vrot.slane %v627, %v635
    %v639 = vmul.f32 %v624, %v632
    %v640 = vmul.f32 %v625, %v636
    %641 = vrot.lane.b32.xlu0 %v508, 96
    %v642 = vpop.permute.xlu0 %641
    %643 = vrot.lane.b32.xlu0 %v509, 96
    %v644 = vpop.permute.xlu0 %643
    %vm645 = vcmp.lt.s32.totalorder %v226, 96
    %v646 = vsel %vm645, %v642, %v644
    %v647 = vsel %vm645, %v644, %v642
    %s648 = scalar_lea.vmem %s11, 7
    %v649 = vld [vmem:[%s648] ss:$8 sm:$0x3]
    %v651 = vlaneseq
    %v652 = vshrl.u32 %v651, 7
    %v653 = vsub.s32 0, %v652
    %v654 = vrot.slane %v649, %v653
    %v655 = vlaneseq
    %v656 = vshrl.u32 %v655, 7
    %v657 = vsub.s32 1, %v656
    %v658 = vrot.slane %v649, %v657
    %v661 = vmul.f32 %v646, %v654
    %v662 = vmul.f32 %v647, %v658
    %663 = vrot.lane.b32.xlu0 %v508, 94
    %v664 = vpop.permute.xlu0 %663
    %665 = vrot.lane.b32.xlu0 %v509, 94
    %v666 = vpop.permute.xlu0 %665
    %vm667 = vcmp.lt.s32.totalorder %v226, 94
    %v668 = vsel %vm667, %v664, %v666
    %v669 = vsel %vm667, %v666, %v664
    %s670 = scalar_lea.vmem %s11, 16
    %v671 = vld [vmem:[%s670] ss:$8 sm:$0x3]
    %v673 = vlaneseq
    %v674 = vshrl.u32 %v673, 7
    %v675 = vsub.s32 0, %v674
    %v676 = vrot.slane %v671, %v675
    %v677 = vlaneseq
    %v678 = vshrl.u32 %v677, 7
    %v679 = vsub.s32 1, %v678
    %v680 = vrot.slane %v671, %v679
    %v683 = vmul.f32 %v668, %v676
    %v684 = vmul.f32 %v669, %v680
    %v685 = vld [vmem:[#allocation8] sm:$0xff]
    %v687 = vsel %vm399, %v685, 0
    %689 = vmatprep.subr.mxu0 0.0
    %690 = vmatpush1.msra.mxu0 0.0
    %691 = vmatprep.subr.mxu0 0.0
    %692 = vmatpush1.msra.mxu0 0.0
    %693 = vmatprep.subr.mxu0 0.0
    %694 = vmatpush1.msra.mxu0 0.0
    %695 = vmatprep.subr.mxu0 0.0
    %696 = vmatpush1.msra.mxu0 0.0
    %697 = vmatprep.subr.mxu0 0.0
    %698 = vmatpush1.msra.mxu0 0.0
    %699 = vmatprep.subr.mxu0 0.0
    %700 = vmatpush1.msra.mxu0 0.0
    %701 = vmatprep.subr.mxu0 0.0
    %702 = vmatpush1.msra.mxu0 0.0
    %703 = vmatprep.subr.mxu0 %v684
    %704 = vmatpush1.msra.mxu0 %v683
    %705 = vmatprep.subr.mxu0 %v662
    %706 = vmatpush1.msra.mxu0 %v661
    %707 = vmatprep.subr.mxu0 %v640
    %708 = vmatpush1.msra.mxu0 %v639
    %709 = vmatprep.subr.mxu0 %v618
    %710 = vmatpush1.msra.mxu0 %v617
    %711 = vmatprep.subr.mxu0 %v509
    %712 = vmatpush1.msra.mxu0 %v508
    %713 = vmatprep.subr.mxu0 %v596
    %714 = vmatpush1.msra.mxu0 %v595
    %715 = vmatprep.subr.mxu0 %v574
    %716 = vmatpush1.msra.mxu0 %v573
    %717 = vmatprep.subr.mxu0 %v552
    %718 = vmatpush1.msra.mxu0 %v551
    %719 = vmatprep.subr.mxu0 %v530
    %720 = vmatpush1.msra.mxu0 %v529
    %721 = vmatprep.subr.mxu0 0.0
    %722 = vmatpush2.msra.mxu0 0.0
    %723 = vmatprep.subr.mxu0 0.0
    %724 = vmatpush2.msra.mxu0 0.0
    %725 = vmatprep.subr.mxu0 0.0
    %726 = vmatpush2.msra.mxu0 0.0
    %727 = vmatprep.subr.mxu0 0.0
    %728 = vmatpush2.msra.mxu0 0.0
    %729 = vmatprep.subr.mxu0 0.0
    %730 = vmatpush2.msra.mxu0 0.0
    %731 = vmatprep.subr.mxu0 0.0
    %732 = vmatpush2.msra.mxu0 0.0
    %733 = vmatprep.subr.mxu0 0.0
    %734 = vmatpush2.msra.mxu0 0.0
    %735 = vmatprep.subr.mxu0 0.0
    %736 = vmatpush2.msra.mxu0 0.0
    %737 = vmatprep.subr.mxu0 0.0
    %738 = vmatpush2.msra.mxu0 0.0
    %739 = vmatprep.subr.mxu0 0.0
    %740 = vmatpush2.msra.mxu0 0.0
    %741 = vmatprep.subr.mxu0 0.0
    %742 = vmatpush2.msra.mxu0 0.0
    %743 = vmatprep.subr.mxu0 0.0
    %744 = vmatpush2.msra.mxu0 0.0
    %745 = vmatprep.subr.mxu0 0.0
    %746 = vmatpush2.msra.mxu0 0.0
    %747 = vmatprep.subr.mxu0 0.0
    %748 = vmatpush2.msra.mxu0 0.0
    %749 = vmatprep.subr.mxu0 0.0
    %750 = vmatpush2.msra.mxu0 0.0
    %751 = vmatprep.subr.mxu0 0.0
    %752 = vmatpush2.msra.mxu0 0.0
    %753 = vmatprep.mubr.f32.mxu0 0.0
    %754 = vmatmul.mubr.f32.gmra.mxu0 %v687
    %v755 = vpop.f32.mrf.mxu0
    %v756 = vadd.f32 0.0, %v755
    %v757 = vpop.f32.mrf.mxu0
    %v758 = vadd.f32 0.0, %v757
    %759 = vdwg.mxu0
    %v760 = vadd.f32 %v89, %v199
    %v761 = vadd.f32 %v90, %v201
    %v762 = vadd.f32 %v760, %v756
    %v763 = vadd.f32 %v761, %v758
    %764 = vst [vmem:[#allocation10] sm:$0xff] %v762
    %765 = vst [vmem:[#allocation10 + $0x8] sm:$0xff] %v763
    // Predicated region
    $region66: #{tpu_custom_call.1} parent=1 // pred_check
      _
    $region67: #{tpu_custom_call.1} parent=1 // pred_check_branch
      %767 = sbr.rel (0) target = $region69
    $region68: #{tpu_custom_call.1} parent=1 // pred_region
      %s769 = ssub.s32 256, 256
      %770 = vsyncadd [#allocation4], %s769
      %s772 = sshll.u32 [#allocation10], 4
      %s773 = int_to_ptr.vmem [resolvable:$true] %s772
      %775 = dma.vmem_to_hbm [thread:$0]  %s773, 256, %s12, [#allocation4]
    $region69: #{tpu_custom_call.1} parent=1 // pred_fallthru
      _
    // Predicated region
    $region70: #{tpu_custom_call.1} parent=1 // pred_check
      _
    $region71: #{tpu_custom_call.1} parent=1 // pred_check_branch
      %777 = sbr.rel (0) target = $region73
    $region72: #{tpu_custom_call.1} parent=1 // pred_region
      %778 = dma.done [#allocation4], 256
    $region73: #{tpu_custom_call.1} parent=1 // pred_fallthru
      _
    %779 = vsyncpa [#allocation3], 1
    %780 = vsyncpa [#allocation6], 1
    %781 = vsyncpa [#allocation9], 1
    %782 = vsyncpa [#allocation4], 1

</llo_original>
